<compile_context>
chip_gen: v5e
topology: v5e:2x2
jax: 0.10.0
libtpu: 0.0.40
codegen_flags: <defaults>
</compile_context>

<pallas_src>
import functools

import numpy as np
import jax
import jax.numpy as jnp
from jax import lax
from jax.experimental import pallas as pl
from jax.experimental.pallas import tpu as pltpu

EPS = 1e-5


# --------------------------------------------------------------------------- #
# Fused CNNBlock kernel (one sample per grid step, everything in VMEM)
# --------------------------------------------------------------------------- #
def _cnn_block_kernel(x_ref, w1_ref, b1_ref, w2_ref, b2_ref, mps_ref, mph_ref,
                      o_ref, *, nb, ks, dilations, cb, cout, t, v, pad_max):
    tv = t * v
    tpv = x_ref.shape[-1]
    off0 = pad_max * v                      # first valid column of the padded slab

    def lshift(arr, s):
        """result[:, c] = arr[:, c + s] (cyclic; wrap only touches discarded cols)."""
        if s == 0:
            return arr
        return pltpu.roll(arr, shift=(-s) % tpv, axis=1)

    x = x_ref[...]                                               # (Cin, Tp*V)

    # ---- every 1x1 conv (+folded BN) of the block in ONE MXU matmul ----------
    y = jnp.dot(w1_ref[...], x, preferred_element_type=jnp.float32) + b1_ref[...]
    nrelu = (nb + 1) * cb                                        # relu'd first-stage rows
    col = lax.broadcasted_iota(jnp.int32, (1, tpv), 1)
    valid = (col >= off0) & (col < off0 + tv)
    # ReLU the first-stage rows and force the temporal pad columns to exactly 0
    # (== PyTorch's zero padding of the second conv's input).
    y1 = jnp.where(valid, jnp.maximum(y[:nrelu], 0.0), 0.0)      # ((nb+1)*cb, TpV)
    pw = y[nrelu:nrelu + cb]                                     # pointwise branch, no relu
    res = y[nrelu + cb:nrelu + cb + cout]                        # block residual (1x1 CBR)

    # ---- all nb dilated (ks,1) temporal convs as ONE block-diagonal matmul ---
    taps = []
    for bi, d in enumerate(dilations):
        pad_i = ((ks - 1) * d) // 2
        yb = y1[bi * cb:(bi + 1) * cb]
        for k in range(ks):
            taps.append(lshift(yb, (k * d - pad_i) * v))
    rhs = jnp.concatenate(taps, axis=0).astype(w2_ref.dtype)     # (nb*ks*cb, TpV)
    tconv = jnp.dot(w2_ref[...], rhs,
                    preferred_element_type=jnp.float32) + b2_ref[...]   # (nb*cb, TpV)

    # ---- maxpool branch: MaxPool2d((3,1), pad (1,0)) + BN ---------------------
    # y1 >= 0 post-ReLU and its pad columns are exactly 0, so zero padding is
    # equivalent to PyTorch's implicit -inf padding for the max.
    ym = y1[nb * cb:nrelu]
    m = jnp.maximum(jnp.maximum(lshift(ym, -v), ym), lshift(ym, v))
    mp = m * mps_ref[...] + mph_ref[...]

    # ---- concat branches, add residual, move padded->valid, single store -----
    outp = jnp.concatenate([tconv, mp, pw], axis=0) + res        # (Cout, TpV) padded frame
    o_ref[...] = lshift(outp, off0)[:, :tv].astype(o_ref.dtype)  # one lane-dense store


def _fold_cbr(c):
    """Fold inference BatchNorm (and conv bias) into the conv weight/bias."""
    scale = c['gamma'] / jnp.sqrt(c['var'] + EPS)                # (Cout,)
    w = c['w'] * scale[:, None, None]                            # (Cout, Cin, k)
    bias = (c['b'] - c['mean']) * scale + c['beta']              # (Cout,)
    return w, bias


def cnn_block_forward(x, p, *, dilations=(1, 2, 3, 4), ks=3,
                      compute_dtype=jnp.float32):
    """CNNBlock forward.  x: (N, Cin, T, V) -> (N, Cout, T, V).  stride=1 only."""
    N, Cin, T, V = x.shape
    nb = len(dilations)
    Cb = p['pw']['w'].shape[0]
    Cout = p['res']['w'].shape[0]
    assert Cout == (nb + 2) * Cb
    # same-length output requires an even effective kernel extension
    assert all(((ks - 1) * d) % 2 == 0 for d in dilations)

    pad_max = max(((ks - 1) * max(dilations)) // 2, 1)           # >=1 for the maxpool
    Tp = T + 2 * pad_max
    TV, TpV = T * V, Tp * V

    # zero-pad time once, keep channel-first, flatten (Tp, V) onto the lane dim
    xp = jnp.pad(x, ((0, 0), (0, 0), (pad_max, pad_max), (0, 0))).reshape(N, Cin, TpV)

    # --- fold & stack parameters at trace time ---------------------------------
    # Stage-1 weight: rows = [branch0 c1 | ... | branch{nb-1} c1 | mp c1 | pw | res]
    w1s, b1s = [], []
    for bi in range(nb):
        w, b = _fold_cbr(p['branches'][bi]['c1'])
        w1s.append(w[:, :, 0]); b1s.append(b)
    w, b = _fold_cbr(p['mp']['c1']); w1s.append(w[:, :, 0]); b1s.append(b)
    w, b = _fold_cbr(p['pw']);       w1s.append(w[:, :, 0]); b1s.append(b)
    w, b = _fold_cbr(p['res']);      w1s.append(w[:, :, 0]); b1s.append(b)
    w1 = jnp.concatenate(w1s, 0)                                 # ((nb+2)*Cb + Cout, Cin)
    b1 = jnp.concatenate(b1s, 0)[:, None]
    R1 = w1.shape[0]

    # Stage-2: block-diagonal stack of the nb dilated temporal convs.
    w2 = jnp.zeros((nb * Cb, nb * ks * Cb), jnp.float32)
    b2s = []
    for bi in range(nb):
        wb, b = _fold_cbr(p['branches'][bi]['c2'])               # (Cb, Cb, ks)
        wb = jnp.concatenate([wb[:, :, k] for k in range(ks)], axis=1)  # (Cb, ks*Cb)
        w2 = w2.at[bi * Cb:(bi + 1) * Cb, bi * ks * Cb:(bi + 1) * ks * Cb].set(wb)
        b2s.append(b)
    b2 = jnp.concatenate(b2s, 0)[:, None]                        # (nb*Cb, 1)

    mbn = p['mp']['bn']
    msc = mbn['gamma'] / jnp.sqrt(mbn['var'] + EPS)
    mp_scale = msc[:, None]
    mp_shift = (mbn['beta'] - mbn['mean'] * msc)[:, None]

    kern = functools.partial(_cnn_block_kernel, nb=nb, ks=ks,
                             dilations=tuple(dilations), cb=Cb, cout=Cout,
                             t=T, v=V, pad_max=pad_max)
    out = pl.pallas_call(
        kern,
        out_shape=jax.ShapeDtypeStruct((N, Cout, TV), jnp.float32),
        grid=(N,),
        in_specs=[
            pl.BlockSpec((None, Cin, TpV), lambda n: (n, 0, 0)),
            pl.BlockSpec((R1, Cin), lambda n: (0, 0)),
            pl.BlockSpec((R1, 1), lambda n: (0, 0)),
            pl.BlockSpec((nb * Cb, nb * ks * Cb), lambda n: (0, 0)),
            pl.BlockSpec((nb * Cb, 1), lambda n: (0, 0)),
            pl.BlockSpec((Cb, 1), lambda n: (0, 0)),
            pl.BlockSpec((Cb, 1), lambda n: (0, 0)),
        ],
        out_specs=pl.BlockSpec((None, Cout, TV), lambda n: (n, 0, 0)),
        compiler_params=pltpu.CompilerParams(dimension_semantics=("parallel",)),
    )(xp.astype(compute_dtype), w1.astype(compute_dtype), b1,
      w2.astype(compute_dtype), b2, mp_scale, mp_shift)
    return out.reshape(N, Cout, T, V)


# --------------------------------------------------------------------------- #
# Deterministic synthetic parameters (shapes follow the PyTorch __init__)
# --------------------------------------------------------------------------- #
def make_params(key, Cin, Cout, *, ks=3, dilations=(1, 2, 3, 4)):
    nb = len(dilations)
    assert Cout % (nb + 2) == 0
    Cb = Cout // (nb + 2)
    kit = iter(jax.random.split(key, 128))

    def cbr_p(ci, co, k):
        return dict(
            w=jax.random.normal(next(kit), (co, ci, k), jnp.float32)
              * np.float32(np.sqrt(2.0 / (ci * k))),
            b=0.1 * jax.random.normal(next(kit), (co,), jnp.float32),
            gamma=1.0 + 0.1 * jax.random.normal(next(kit), (co,), jnp.float32),
            beta=0.1 * jax.random.normal(next(kit), (co,), jnp.float32),
            mean=0.1 * jax.random.normal(next(kit), (co,), jnp.float32),
            var=1.0 + 0.25 * jax.random.uniform(next(kit), (co,), jnp.float32),
        )

    branches = [dict(c1=cbr_p(Cin, Cb, 1), c2=cbr_p(Cb, Cb, ks)) for _ in dilations]
    mp = dict(
        c1=cbr_p(Cin, Cb, 1),
        bn=dict(gamma=1.0 + 0.1 * jax.random.normal(next(kit), (Cb,), jnp.float32),
                beta=0.1 * jax.random.normal(next(kit), (Cb,), jnp.float32),
                mean=0.1 * jax.random.normal(next(kit), (Cb,), jnp.float32),
                var=1.0 + 0.25 * jax.random.uniform(next(kit), (Cb,), jnp.float32)))
    pw = cbr_p(Cin, Cb, 1)
    res = cbr_p(Cin, Cout, 1)   # ResBlock with Cin != Cout -> 1x1 CBR, relu=False
    return dict(branches=branches, mp=mp, pw=pw, res=res)


# --------------------------------------------------------------------------- #
# Pure-JAX reference (independent code path) for validation
# --------------------------------------------------------------------------- #
def _ref_bn(y, c):
    s = (c['gamma'] / jnp.sqrt(c['var'] + EPS))[None, :, None, None]
    return (y - c['mean'][None, :, None, None]) * s + c['beta'][None, :, None, None]


def _ref_cbr(x, c, dilation=1, relu=True):
    k = c['w'].shape[-1]
    pad = ((k - 1) * dilation) // 2
    y = lax.conv_general_dilated(
        x, c['w'][:, :, :, None], window_strides=(1, 1),
        padding=((pad, pad), (0, 0)), rhs_dilation=(dilation, 1),
        dimension_numbers=('NCHW', 'OIHW', 'NCHW'))
    y = _ref_bn(y + c['b'][None, :, None, None], c)
    return jnp.maximum(y, 0.0) if relu else y


def ref_forward(x, p, *, dilations=(1, 2, 3, 4), ks=3):
    del ks  # kernel size is carried by the stored weights
    T = x.shape[2]
    outs = []
    for bi, d in enumerate(dilations):
        t1 = _ref_cbr(x, p['branches'][bi]['c1'], relu=True)
        outs.append(_ref_cbr(t1, p['branches'][bi]['c2'], dilation=d, relu=False))
    t1 = _ref_cbr(x, p['mp']['c1'], relu=True)
    tp = jnp.pad(t1, ((0, 0), (0, 0), (1, 1), (0, 0)), constant_values=-jnp.inf)
    m = jnp.maximum(jnp.maximum(tp[:, :, 0:T], tp[:, :, 1:T + 1]), tp[:, :, 2:T + 2])
    outs.append(_ref_bn(m, p['mp']['bn']))
    outs.append(_ref_cbr(x, p['pw'], relu=False))
    res = _ref_cbr(x, p['res'], relu=False)
    return jnp.concatenate(outs, axis=1) + res


# --------------------------------------------------------------------------- #
if __name__ == "__main__":
    N, Cin, Cout, T, V = 2, 16, 48, 8, 16            # T*V = 128 -> lane-dense tiles
    dilations, ks = (1, 2, 3, 4), 3                  # CNNBlock defaults
    key = jax.random.PRNGKey(0)
    kx, kp = jax.random.split(key)
    x = jax.random.normal(kx, (N, Cin, T, V), jnp.float32)
    params = make_params(kp, Cin, Cout, ks=ks, dilations=dilations)

    fwd = jax.jit(functools.partial(cnn_block_forward, dilations=dilations, ks=ks))
    out = jax.block_until_ready(fwd(x, params))
    assert out.shape == (N, Cout, T, V), out.shape

    ref = ref_forward(x, params, dilations=dilations, ks=ks)
    np.testing.assert_allclose(np.asarray(out), np.asarray(ref), rtol=5e-3, atol=5e-3)
    print("KERNEL_OK")
</pallas_src>

<mosaic_0001>
module attributes {stable_mosaic.version = 11 : i64} {
  func.func @_cnn_block_kernel(%arg0: i32, %arg1: memref<1x16x256xf32, #tpu.memory_space<vmem>>, %arg2: memref<96x16xf32, #tpu.memory_space<vmem>>, %arg3: memref<96x1xf32, #tpu.memory_space<vmem>>, %arg4: memref<32x96xf32, #tpu.memory_space<vmem>>, %arg5: memref<32x1xf32, #tpu.memory_space<vmem>>, %arg6: memref<8x1xf32, #tpu.memory_space<vmem>>, %arg7: memref<8x1xf32, #tpu.memory_space<vmem>>, %arg8: memref<1x48x128xf32, #tpu.memory_space<vmem>>) attributes {dimension_semantics = [#tpu.dimension_semantics<parallel>], iteration_bounds = array<i64: 2>, scalar_prefetch = 0 : i64, scratch_operands = 0 : i64, tpu.core_type = #tpu.core_type<tc>, window_params = [{transform_indices = @transform_0, window_bounds = array<i64: 1, 16, 256>}, {pipeline_mode = #tpu.pipeline_mode<synchronous>, transform_indices = @transform_1, window_bounds = array<i64: 96, 16>}, {pipeline_mode = #tpu.pipeline_mode<synchronous>, transform_indices = @transform_2, window_bounds = array<i64: 96, 1>}, {pipeline_mode = #tpu.pipeline_mode<synchronous>, transform_indices = @transform_3, window_bounds = array<i64: 32, 96>}, {pipeline_mode = #tpu.pipeline_mode<synchronous>, transform_indices = @transform_4, window_bounds = array<i64: 32, 1>}, {pipeline_mode = #tpu.pipeline_mode<synchronous>, transform_indices = @transform_5, window_bounds = array<i64: 8, 1>}, {pipeline_mode = #tpu.pipeline_mode<synchronous>, transform_indices = @transform_6, window_bounds = array<i64: 8, 1>}, {transform_indices = @transform_7, window_bounds = array<i64: 1, 48, 128>}]} {
    %c0 = arith.constant 0 : index
    %c0_0 = arith.constant 0 : index
    %c0_1 = arith.constant 0 : index
    %0 = vector.load %arg1[%c0, %c0_0, %c0_1] : memref<1x16x256xf32, #tpu.memory_space<vmem>>, vector<1x16x256xf32>
    %1 = vector.shape_cast %0 : vector<1x16x256xf32> to vector<16x256xf32>
    %c0_2 = arith.constant 0 : index
    %c0_3 = arith.constant 0 : index
    %2 = vector.load %arg2[%c0_2, %c0_3] : memref<96x16xf32, #tpu.memory_space<vmem>>, vector<96x16xf32>
    %cst = arith.constant dense<0.000000e+00> : vector<96x256xf32>
    %3 = tpu.matmul %2, %1, %cst {dimension_numbers = #tpu.dot_dimension_numbers<[1], [0], [0], [1], [0, 0, 1, 1], [], []>} : vector<96x16xf32>, vector<16x256xf32>, vector<96x256xf32> -> vector<96x256xf32>
    %c0_4 = arith.constant 0 : index
    %c0_5 = arith.constant 0 : index
    %4 = vector.load %arg3[%c0_4, %c0_5] : memref<96x1xf32, #tpu.memory_space<vmem>>, vector<96x1xf32>
    %5 = vector.broadcast %4 : vector<96x1xf32> to vector<96x256xf32>
    %6 = arith.addf %3, %5 : vector<96x256xf32>
    %7 = tpu.iota {dimensions = array<i32: 1>} : vector<1x256xi32>
    %c64_i32 = arith.constant 64 : i32
    %8 = vector.broadcast %c64_i32 : i32 to vector<1x256xi32>
    %9 = arith.cmpi sge, %7, %8 : vector<1x256xi32>
    %c192_i32 = arith.constant 192 : i32
    %10 = vector.broadcast %c192_i32 : i32 to vector<1x256xi32>
    %11 = arith.cmpi slt, %7, %10 : vector<1x256xi32>
    %12 = arith.andi %9, %11 : vector<1x256xi1>
    %13 = vector.extract_strided_slice %6 {offsets = [0, 0], sizes = [40, 256], strides = [1, 1]} : vector<96x256xf32> to vector<40x256xf32>
    %cst_6 = arith.constant 0.000000e+00 : f32
    %14 = vector.broadcast %cst_6 : f32 to vector<40x256xf32>
    %15 = arith.maximumf %13, %14 : vector<40x256xf32>
    %cst_7 = arith.constant 0.000000e+00 : f32
    %16 = vector.shape_cast %12 : vector<1x256xi1> to vector<1x256xi1>
    %17 = vector.broadcast %16 : vector<1x256xi1> to vector<40x256xi1>
    %18 = vector.broadcast %cst_7 : f32 to vector<40x256xf32>
    %19 = arith.select %17, %15, %18 : vector<40x256xi1>, vector<40x256xf32>
    %20 = vector.extract_strided_slice %6 {offsets = [40, 0], sizes = [8, 256], strides = [1, 1]} : vector<96x256xf32> to vector<8x256xf32>
    %21 = vector.extract_strided_slice %6 {offsets = [48, 0], sizes = [48, 256], strides = [1, 1]} : vector<96x256xf32> to vector<48x256xf32>
    %22 = vector.extract_strided_slice %19 {offsets = [0, 0], sizes = [8, 256], strides = [1, 1]} : vector<40x256xf32> to vector<8x256xf32>
    %c16_i32 = arith.constant 16 : i32
    %23 = tpu.dynamic_rotate %22 by %c16_i32 dim 1 : vector<8x256xf32>, i32 -> vector<8x256xf32>
    %c240_i32 = arith.constant 240 : i32
    %24 = tpu.dynamic_rotate %22 by %c240_i32 dim 1 : vector<8x256xf32>, i32 -> vector<8x256xf32>
    %25 = vector.extract_strided_slice %19 {offsets = [8, 0], sizes = [8, 256], strides = [1, 1]} : vector<40x256xf32> to vector<8x256xf32>
    %c32_i32 = arith.constant 32 : i32
    %26 = tpu.dynamic_rotate %25 by %c32_i32 dim 1 : vector<8x256xf32>, i32 -> vector<8x256xf32>
    %c224_i32 = arith.constant 224 : i32
    %27 = tpu.dynamic_rotate %25 by %c224_i32 dim 1 : vector<8x256xf32>, i32 -> vector<8x256xf32>
    %28 = vector.extract_strided_slice %19 {offsets = [16, 0], sizes = [8, 256], strides = [1, 1]} : vector<40x256xf32> to vector<8x256xf32>
    %c48_i32 = arith.constant 48 : i32
    %29 = tpu.dynamic_rotate %28 by %c48_i32 dim 1 : vector<8x256xf32>, i32 -> vector<8x256xf32>
    %c208_i32 = arith.constant 208 : i32
    %30 = tpu.dynamic_rotate %28 by %c208_i32 dim 1 : vector<8x256xf32>, i32 -> vector<8x256xf32>
    %31 = vector.extract_strided_slice %19 {offsets = [24, 0], sizes = [8, 256], strides = [1, 1]} : vector<40x256xf32> to vector<8x256xf32>
    %c64_i32_8 = arith.constant 64 : i32
    %32 = tpu.dynamic_rotate %31 by %c64_i32_8 dim 1 : vector<8x256xf32>, i32 -> vector<8x256xf32>
    %c192_i32_9 = arith.constant 192 : i32
    %33 = tpu.dynamic_rotate %31 by %c192_i32_9 dim 1 : vector<8x256xf32>, i32 -> vector<8x256xf32>
    %34 = tpu.concatenate %23, %22, %24, %26, %25, %27, %29, %28, %30, %32, %31, %33 in 0 : vector<8x256xf32>, vector<8x256xf32>, vector<8x256xf32>, vector<8x256xf32>, vector<8x256xf32>, vector<8x256xf32>, vector<8x256xf32>, vector<8x256xf32>, vector<8x256xf32>, vector<8x256xf32>, vector<8x256xf32>, vector<8x256xf32> -> vector<96x256xf32>
    %c0_10 = arith.constant 0 : index
    %c0_11 = arith.constant 0 : index
    %35 = vector.load %arg4[%c0_10, %c0_11] : memref<32x96xf32, #tpu.memory_space<vmem>>, vector<32x96xf32>
    %cst_12 = arith.constant dense<0.000000e+00> : vector<32x256xf32>
    %36 = tpu.matmul %35, %34, %cst_12 {dimension_numbers = #tpu.dot_dimension_numbers<[1], [0], [0], [1], [0, 0, 1, 1], [], []>} : vector<32x96xf32>, vector<96x256xf32>, vector<32x256xf32> -> vector<32x256xf32>
    %c0_13 = arith.constant 0 : index
    %c0_14 = arith.constant 0 : index
    %37 = vector.load %arg5[%c0_13, %c0_14] : memref<32x1xf32, #tpu.memory_space<vmem>>, vector<32x1xf32>
    %38 = vector.broadcast %37 : vector<32x1xf32> to vector<32x256xf32>
    %39 = arith.addf %36, %38 : vector<32x256xf32>
    %40 = vector.extract_strided_slice %19 {offsets = [32, 0], sizes = [8, 256], strides = [1, 1]} : vector<40x256xf32> to vector<8x256xf32>
    %c16_i32_15 = arith.constant 16 : i32
    %41 = tpu.dynamic_rotate %40 by %c16_i32_15 dim 1 : vector<8x256xf32>, i32 -> vector<8x256xf32>
    %42 = arith.maximumf %41, %40 : vector<8x256xf32>
    %c240_i32_16 = arith.constant 240 : i32
    %43 = tpu.dynamic_rotate %40 by %c240_i32_16 dim 1 : vector<8x256xf32>, i32 -> vector<8x256xf32>
    %44 = arith.maximumf %42, %43 : vector<8x256xf32>
    %c0_17 = arith.constant 0 : index
    %c0_18 = arith.constant 0 : index
    %45 = vector.load %arg6[%c0_17, %c0_18] : memref<8x1xf32, #tpu.memory_space<vmem>>, vector<8x1xf32>
    %46 = vector.broadcast %45 : vector<8x1xf32> to vector<8x256xf32>
    %47 = arith.mulf %44, %46 : vector<8x256xf32>
    %c0_19 = arith.constant 0 : index
    %c0_20 = arith.constant 0 : index
    %48 = vector.load %arg7[%c0_19, %c0_20] : memref<8x1xf32, #tpu.memory_space<vmem>>, vector<8x1xf32>
    %49 = vector.broadcast %48 : vector<8x1xf32> to vector<8x256xf32>
    %50 = arith.addf %47, %49 : vector<8x256xf32>
    %51 = tpu.concatenate %39, %50, %20 in 0 : vector<32x256xf32>, vector<8x256xf32>, vector<8x256xf32> -> vector<48x256xf32>
    %52 = arith.addf %51, %21 : vector<48x256xf32>
    %c192_i32_21 = arith.constant 192 : i32
    %53 = tpu.dynamic_rotate %52 by %c192_i32_21 dim 1 : vector<48x256xf32>, i32 -> vector<48x256xf32>
    %54 = vector.extract_strided_slice %53 {offsets = [0, 0], sizes = [48, 128], strides = [1, 1]} : vector<48x256xf32> to vector<48x128xf32>
    %c0_22 = arith.constant 0 : index
    %c0_23 = arith.constant 0 : index
    %c0_24 = arith.constant 0 : index
    %55 = vector.load %arg8[%c0_22, %c0_23, %c0_24] : memref<1x48x128xf32, #tpu.memory_space<vmem>>, vector<1x48x128xf32>
    %56 = vector.shape_cast %55 : vector<1x48x128xf32> to vector<48x128xf32>
    %57 = vector.shape_cast %54 : vector<48x128xf32> to vector<1x48x128xf32>
    tpu.vector_store %arg8[%c0_22, %c0_23, %c0_24], %57 {strides = array<i32>} : memref<1x48x128xf32, #tpu.memory_space<vmem>>, vector<1x48x128xf32>,
    return
  }
  func.func @transform_0(%arg0: i32) -> (i32, i32, i32) {
    %c0_i32 = arith.constant 0 : i32
    %c0_i32_0 = arith.constant 0 : i32
    %c0_i32_1 = arith.constant 0 : i32
    return %arg0, %c0_i32, %c0_i32_0 : i32, i32, i32
  }
  func.func @transform_1(%arg0: i32) -> (i32, i32) {
    %c0_i32 = arith.constant 0 : i32
    %c0_i32_0 = arith.constant 0 : i32
    %c0_i32_1 = arith.constant 0 : i32
    return %c0_i32, %c0_i32_0 : i32, i32
  }
  func.func @transform_2(%arg0: i32) -> (i32, i32) {
    %c0_i32 = arith.constant 0 : i32
    %c0_i32_0 = arith.constant 0 : i32
    %c0_i32_1 = arith.constant 0 : i32
    return %c0_i32, %c0_i32_0 : i32, i32
  }
  func.func @transform_3(%arg0: i32) -> (i32, i32) {
    %c0_i32 = arith.constant 0 : i32
    %c0_i32_0 = arith.constant 0 : i32
    %c0_i32_1 = arith.constant 0 : i32
    return %c0_i32, %c0_i32_0 : i32, i32
  }
  func.func @transform_4(%arg0: i32) -> (i32, i32) {
    %c0_i32 = arith.constant 0 : i32
    %c0_i32_0 = arith.constant 0 : i32
    %c0_i32_1 = arith.constant 0 : i32
    return %c0_i32, %c0_i32_0 : i32, i32
  }
  func.func @transform_5(%arg0: i32) -> (i32, i32) {
    %c0_i32 = arith.constant 0 : i32
    %c0_i32_0 = arith.constant 0 : i32
    %c0_i32_1 = arith.constant 0 : i32
    return %c0_i32, %c0_i32_0 : i32, i32
  }
  func.func @transform_6(%arg0: i32) -> (i32, i32) {
    %c0_i32 = arith.constant 0 : i32
    %c0_i32_0 = arith.constant 0 : i32
    %c0_i32_1 = arith.constant 0 : i32
    return %c0_i32, %c0_i32_0 : i32, i32
  }
  func.func @transform_7(%arg0: i32) -> (i32, i32, i32) {
    %c0_i32 = arith.constant 0 : i32
    %c0_i32_0 = arith.constant 0 : i32
    %c0_i32_1 = arith.constant 0 : i32
    return %arg0, %c0_i32, %c0_i32_0 : i32, i32, i32
  }
}

</mosaic_0001>

<llo_original>
// kernel: cnn_block_forward.1
$region0: #{cnn_block_forward.1}
  #allocation0 [shape = 'u32[]', space=smem, size = 0x4, offset = 0x4, fixed_abs, tag = 'smem constant byte address 0x4 - core index']
  #allocation1 [shape = 'u32[72,128]{1,0:T(1,128)}', space=vmem, size = 0x9000, scoped, tag = 'internal scratch']
  %s0 = inlined_call_operand.vmem [shape: f32[2,16,256], index: 0, kind: input, shape index: {}]
  %s1 = inlined_call_operand.vmem [shape: f32[96,16], index: 1, kind: input, shape index: {}]
  %s2 = inlined_call_operand.vmem [shape: f32[96,1], index: 2, kind: input, shape index: {}]
  %s3 = inlined_call_operand.vmem [shape: f32[32,96], index: 3, kind: input, shape index: {}]
  %s4 = inlined_call_operand.vmem [shape: f32[32,1], index: 4, kind: input, shape index: {}]
  %s5 = inlined_call_operand.vmem [shape: f32[8,1], index: 5, kind: input, shape index: {}]
  %s6 = inlined_call_operand.vmem [shape: f32[8,1], index: 6, kind: input, shape index: {}]
  %s7 = inlined_call_operand.vmem [shape: f32[2,48,128], index: 7, kind: output, shape index: {}]
  %s8 = sld [smem:[#allocation0]]
  $region61: #{cnn_block_forward.1} parent=0
    _
  %s10 = ssub.s32 1, %s8
  %s11 = scalar_select 0, %s10, %s8
  loop: start=0, step=1, limit=4
  $region2: #{cnn_block_forward.1} parent=0 // loop_pre_header
    _
  $region3: #{cnn_block_forward.1} parent=0 // loop_header
    %s13 = sphi 0, %s17
    %p14 = scmp.ge.s32.totalorder %s13, 4
    %s23 = sphi 0, %s25
    %s26 = sphi 0, %s23
    %s27 = sphi 0, %s26
    %s43 = sphi 0, %s27
    %s47 = sphi 0, %s47
    %s49 = sphi 0, %s47
    %s50 = sphi 0, %s49
    %s64 = sphi 0, %s50
    %s68 = sphi 0, %s68
    %s70 = sphi 0, %s68
    %s71 = sphi 0, %s70
    %s85 = sphi 0, %s71
    %s89 = sphi 0, %s89
    %s91 = sphi 0, %s89
    %s92 = sphi 0, %s91
    %s106 = sphi 0, %s92
    %s110 = sphi 0, %s110
    %s112 = sphi 0, %s110
    %s113 = sphi 0, %s112
    %s127 = sphi 0, %s113
    %s131 = sphi 0, %s131
    %s133 = sphi 0, %s131
    %s134 = sphi 0, %s133
    %s148 = sphi 0, %s134
    %s152 = sphi 0, %s152
    %s154 = sphi 0, %s152
    %s155 = sphi 0, %s154
    %s169 = sphi 0, %s155
    %s175 = sphi 0, %s177
    %s178 = sphi 0, %s175
    %s179 = sphi 0, %s178
    %s195 = sphi 0, %s179
  $region4: #{cnn_block_forward.1} parent=0 // loop_header_branch
    %16 = sbr.rel (%p14) target = $region8
  $region5: #{cnn_block_forward.1} parent=0 // loop_body
    %s18 = ssub.s32 %s13, 1
    %s19 = ssub.s32 %s13, 2
    %s20 = sadd.s32 %s13, 1
    %s21 = ssub.s32 %s13, %s20
    %p22 = scmp.eq.s32.totalorder %s21, 0
    %s24 = sadd.s32 %s23, 1
    %s25 = scalar_select %p22, %s23, %s24
    %p28 = pneg %p22
    %p29 = scmp.eq.s32.totalorder %s13, 1
    %p30 = por %p28, %p29
    %p31 = scmp.ne.s32.totalorder %s23, %s26
    %p32 = scmp.eq.s32.totalorder %s13, 0
    %p33 = por %p31, %p32
    %p34 = scmp.ne.s32.totalorder %s23, %s26
    %p35 = scmp.eq.s32.totalorder %s18, 1
    %p36 = por %p34, %p35
    %p37 = scmp.ne.s32.totalorder %s26, %s27
    %p38 = scmp.eq.s32.totalorder %s18, 0
    %p39 = por %p37, %p38
    %p40 = scmp.ne.s32.totalorder %s26, %s27
    %p41 = scmp.eq.s32.totalorder %s19, 1
    %p42 = por %p40, %p41
    %p44 = scmp.ne.s32.totalorder %s27, %s43
    %p45 = scmp.eq.s32.totalorder %s19, 0
    %p46 = por %p44, %p45
    %s48 = sadd.s32 %s47, 1
    %p51 = scmp.eq.s32.totalorder %s13, 1
    %p52 = scmp.ne.s32.totalorder %s47, %s49
    %p53 = scmp.eq.s32.totalorder %s13, 0
    %p54 = por %p52, %p53
    %p55 = scmp.ne.s32.totalorder %s47, %s49
    %p56 = scmp.eq.s32.totalorder %s18, 1
    %p57 = por %p55, %p56
    %p58 = scmp.ne.s32.totalorder %s49, %s50
    %p59 = scmp.eq.s32.totalorder %s18, 0
    %p60 = por %p58, %p59
    %p61 = scmp.ne.s32.totalorder %s49, %s50
    %p62 = scmp.eq.s32.totalorder %s19, 1
    %p63 = por %p61, %p62
    %p65 = scmp.ne.s32.totalorder %s50, %s64
    %p66 = scmp.eq.s32.totalorder %s19, 0
    %p67 = por %p65, %p66
    %s69 = sadd.s32 %s68, 1
    %p72 = scmp.eq.s32.totalorder %s13, 1
    %p73 = scmp.ne.s32.totalorder %s68, %s70
    %p74 = scmp.eq.s32.totalorder %s13, 0
    %p75 = por %p73, %p74
    %p76 = scmp.ne.s32.totalorder %s68, %s70
    %p77 = scmp.eq.s32.totalorder %s18, 1
    %p78 = por %p76, %p77
    %p79 = scmp.ne.s32.totalorder %s70, %s71
    %p80 = scmp.eq.s32.totalorder %s18, 0
    %p81 = por %p79, %p80
    %p82 = scmp.ne.s32.totalorder %s70, %s71
    %p83 = scmp.eq.s32.totalorder %s19, 1
    %p84 = por %p82, %p83
    %p86 = scmp.ne.s32.totalorder %s71, %s85
    %p87 = scmp.eq.s32.totalorder %s19, 0
    %p88 = por %p86, %p87
    %s90 = sadd.s32 %s89, 1
    %p93 = scmp.eq.s32.totalorder %s13, 1
    %p94 = scmp.ne.s32.totalorder %s89, %s91
    %p95 = scmp.eq.s32.totalorder %s13, 0
    %p96 = por %p94, %p95
    %p97 = scmp.ne.s32.totalorder %s89, %s91
    %p98 = scmp.eq.s32.totalorder %s18, 1
    %p99 = por %p97, %p98
    %p100 = scmp.ne.s32.totalorder %s91, %s92
    %p101 = scmp.eq.s32.totalorder %s18, 0
    %p102 = por %p100, %p101
    %p103 = scmp.ne.s32.totalorder %s91, %s92
    %p104 = scmp.eq.s32.totalorder %s19, 1
    %p105 = por %p103, %p104
    %p107 = scmp.ne.s32.totalorder %s92, %s106
    %p108 = scmp.eq.s32.totalorder %s19, 0
    %p109 = por %p107, %p108
    %s111 = sadd.s32 %s110, 1
    %p114 = scmp.eq.s32.totalorder %s13, 1
    %p115 = scmp.ne.s32.totalorder %s110, %s112
    %p116 = scmp.eq.s32.totalorder %s13, 0
    %p117 = por %p115, %p116
    %p118 = scmp.ne.s32.totalorder %s110, %s112
    %p119 = scmp.eq.s32.totalorder %s18, 1
    %p120 = por %p118, %p119
    %p121 = scmp.ne.s32.totalorder %s112, %s113
    %p122 = scmp.eq.s32.totalorder %s18, 0
    %p123 = por %p121, %p122
    %p124 = scmp.ne.s32.totalorder %s112, %s113
    %p125 = scmp.eq.s32.totalorder %s19, 1
    %p126 = por %p124, %p125
    %p128 = scmp.ne.s32.totalorder %s113, %s127
    %p129 = scmp.eq.s32.totalorder %s19, 0
    %p130 = por %p128, %p129
    %s132 = sadd.s32 %s131, 1
    %p135 = scmp.eq.s32.totalorder %s13, 1
    %p136 = scmp.ne.s32.totalorder %s131, %s133
    %p137 = scmp.eq.s32.totalorder %s13, 0
    %p138 = por %p136, %p137
    %p139 = scmp.ne.s32.totalorder %s131, %s133
    %p140 = scmp.eq.s32.totalorder %s18, 1
    %p141 = por %p139, %p140
    %p142 = scmp.ne.s32.totalorder %s133, %s134
    %p143 = scmp.eq.s32.totalorder %s18, 0
    %p144 = por %p142, %p143
    %p145 = scmp.ne.s32.totalorder %s133, %s134
    %p146 = scmp.eq.s32.totalorder %s19, 1
    %p147 = por %p145, %p146
    %p149 = scmp.ne.s32.totalorder %s134, %s148
    %p150 = scmp.eq.s32.totalorder %s19, 0
    %p151 = por %p149, %p150
    %s153 = sadd.s32 %s152, 1
    %p156 = scmp.eq.s32.totalorder %s13, 1
    %p157 = scmp.ne.s32.totalorder %s152, %s154
    %p158 = scmp.eq.s32.totalorder %s13, 0
    %p159 = por %p157, %p158
    %p160 = scmp.ne.s32.totalorder %s152, %s154
    %p161 = scmp.eq.s32.totalorder %s18, 1
    %p162 = por %p160, %p161
    %p163 = scmp.ne.s32.totalorder %s154, %s155
    %p164 = scmp.eq.s32.totalorder %s18, 0
    %p165 = por %p163, %p164
    %p166 = scmp.ne.s32.totalorder %s154, %s155
    %p167 = scmp.eq.s32.totalorder %s19, 1
    %p168 = por %p166, %p167
    %p170 = scmp.ne.s32.totalorder %s155, %s169
    %p171 = scmp.eq.s32.totalorder %s19, 0
    %p172 = por %p170, %p171
    %s173 = ssub.s32 %s13, %s20
    %p174 = scmp.eq.s32.totalorder %s173, 0
    %s176 = sadd.s32 %s175, 1
    %s177 = scalar_select %p174, %s175, %s176
    %p180 = pneg %p174
    %p181 = scmp.eq.s32.totalorder %s13, 1
    %p182 = por %p180, %p181
    %p183 = scmp.ne.s32.totalorder %s175, %s178
    %p184 = scmp.eq.s32.totalorder %s13, 0
    %p185 = por %p183, %p184
    %p186 = scmp.ne.s32.totalorder %s175, %s178
    %p187 = scmp.eq.s32.totalorder %s18, 1
    %p188 = por %p186, %p187
    %p189 = scmp.ne.s32.totalorder %s178, %s179
    %p190 = scmp.eq.s32.totalorder %s18, 0
    %p191 = por %p189, %p190
    %p192 = scmp.ne.s32.totalorder %s178, %s179
    %p193 = scmp.eq.s32.totalorder %s19, 1
    %p194 = por %p192, %p193
    %p196 = scmp.ne.s32.totalorder %s179, %s195
    %p197 = scmp.eq.s32.totalorder %s19, 0
    %p198 = por %p196, %p197
    %p199 = scmp.le.s32.totalorder 1, %s13
    %p200 = scmp.lt.s32.totalorder %s13, 3
    %p201 = pnand %p199, %p200
    %p202 = pneg %p201
    // Predicated region
    $region9: #{cnn_block_forward.1} parent=5 // pred_check
      _
    $region10: #{cnn_block_forward.1} parent=5 // pred_check_branch
      %204 = sbr.rel (%p201) target = $region12
    $region11: #{cnn_block_forward.1} parent=5 // pred_region
      %s205 = ssub.s32 %s13, 1
      // Predicated region
      $region13: #{cnn_block_forward.1} parent=11 // pred_check
        %p206 = pneg %p60
      $region14: #{cnn_block_forward.1} parent=11 // pred_check_branch
        %208 = sbr.rel (%p206) target = $region16
      $region15: #{cnn_block_forward.1} parent=11 // pred_region
        _
      $region16: #{cnn_block_forward.1} parent=11 // pred_fallthru
        _
      // Predicated region
      $region17: #{cnn_block_forward.1} parent=11 // pred_check
        %p209 = pneg %p81
      $region18: #{cnn_block_forward.1} parent=11 // pred_check_branch
        %211 = sbr.rel (%p209) target = $region20
      $region19: #{cnn_block_forward.1} parent=11 // pred_region
        _
      $region20: #{cnn_block_forward.1} parent=11 // pred_fallthru
        _
      // Predicated region
      $region21: #{cnn_block_forward.1} parent=11 // pred_check
        %p212 = pneg %p102
      $region22: #{cnn_block_forward.1} parent=11 // pred_check_branch
        %214 = sbr.rel (%p212) target = $region24
      $region23: #{cnn_block_forward.1} parent=11 // pred_region
        _
      $region24: #{cnn_block_forward.1} parent=11 // pred_fallthru
        _
      // Predicated region
      $region25: #{cnn_block_forward.1} parent=11 // pred_check
        %p215 = pneg %p123
      $region26: #{cnn_block_forward.1} parent=11 // pred_check_branch
        %217 = sbr.rel (%p215) target = $region28
      $region27: #{cnn_block_forward.1} parent=11 // pred_region
        _
      $region28: #{cnn_block_forward.1} parent=11 // pred_fallthru
        _
      // Predicated region
      $region29: #{cnn_block_forward.1} parent=11 // pred_check
        %p218 = pneg %p144
      $region30: #{cnn_block_forward.1} parent=11 // pred_check_branch
        %220 = sbr.rel (%p218) target = $region32
      $region31: #{cnn_block_forward.1} parent=11 // pred_region
        _
      $region32: #{cnn_block_forward.1} parent=11 // pred_fallthru
        _
      // Predicated region
      $region33: #{cnn_block_forward.1} parent=11 // pred_check
        %p221 = pneg %p165
      $region34: #{cnn_block_forward.1} parent=11 // pred_check_branch
        %223 = sbr.rel (%p221) target = $region36
      $region35: #{cnn_block_forward.1} parent=11 // pred_region
        _
      $region36: #{cnn_block_forward.1} parent=11 // pred_fallthru
        _
    $region12: #{cnn_block_forward.1} parent=5 // pred_fallthru
      _
    %p224 = scmp.lt.s32.totalorder %s13, 2
    // Predicated region
    $region37: #{cnn_block_forward.1} parent=5 // pred_check
      %p225 = pneg %p224
    $region38: #{cnn_block_forward.1} parent=5 // pred_check_branch
      %227 = sbr.rel (%p225) target = $region40
    $region39: #{cnn_block_forward.1} parent=5 // pred_region
      // Predicated region
      $region41: #{cnn_block_forward.1} parent=39 // pred_check
        %p228 = pneg %p33
      $region42: #{cnn_block_forward.1} parent=39 // pred_check_branch
        %230 = sbr.rel (%p228) target = $region44
      $region43: #{cnn_block_forward.1} parent=39 // pred_region
        %p231 = scmp.lt.s32.totalorder %s13, 1
        %s232 = scalar_select %p231, %s13, 1
        %s233 = smul.addr %s232, 4
        %s234 = smul.addr %s233, 8
        %s235 = scalar_lea.vmem %s0, %s234
      $region44: #{cnn_block_forward.1} parent=39 // pred_fallthru
        _
    $region40: #{cnn_block_forward.1} parent=5 // pred_fallthru
      _
    %p236 = scmp.le.s32.totalorder 1, %s13
    %p237 = scmp.lt.s32.totalorder %s13, 3
    %p238 = pnand %p236, %p237
    %p239 = pneg %p238
    // Predicated region
    $region45: #{cnn_block_forward.1} parent=5 // pred_check
      _
    $region46: #{cnn_block_forward.1} parent=5 // pred_check_branch
      %241 = sbr.rel (%p238) target = $region48
    $region47: #{cnn_block_forward.1} parent=5 // pred_region
      %s242 = ssub.s32 %s13, 1
      %p243 = scmp.lt.s32.totalorder %s18, 1
      %s244 = scalar_select %p243, %s18, 1
      %s245 = smul.addr %s244, 4
      %s246 = smul.addr %s245, 8
      %s247 = scalar_lea.vmem %s0, %s246
      %p248 = pneg %p39
      %p249 = pneg %p36
      %p250 = pneg %p60
      %p251 = pneg %p57
      %p252 = pneg %p81
      %p253 = pneg %p78
      %p254 = pneg %p102
      %p255 = pneg %p99
      %p256 = pneg %p123
      %p257 = pneg %p120
      %p258 = pneg %p144
      %p259 = pneg %p141
      %p260 = pneg %p165
      %p261 = pneg %p162
      %p262 = pneg %p191
      %p263 = pneg %p188
      %p264 = scmp.lt.s32.totalorder %s18, 1
      %s265 = scalar_select %p264, %s18, 1
      %s266 = smul.addr %s265, 6
      %s267 = smul.addr %s266, 8
      %s268 = scalar_lea.vmem %s7, %s267
      %p269 = scmp.lt.s32.totalorder %s18, 1
      %s270 = scalar_select %p269, %s18, 1
      %s271 = smul.addr %s270, 4
      %s272 = smul.addr %s271, 8
      %s273 = scalar_lea.vmem %s0, %s272
      %p274 = scmp.lt.s32.totalorder %s18, 1
      %s275 = scalar_select %p274, %s18, 1
      %s276 = smul.addr %s275, 6
      %s277 = smul.addr %s276, 8
      %s278 = scalar_lea.vmem %s7, %s277
      %v279 = vld [vmem:[%s273] sm:$0xff]
      %v280 = vld [vmem:[%s273 + $0x8] sm:$0xff]
      %v281 = vld [vmem:[%s273 + $0x10] sm:$0xff]
      %v282 = vld [vmem:[%s273 + $0x18] sm:$0xff]
      %v283 = vld [vmem:[%s1] sm:$0xff]
      %v284 = vld [vmem:[%s1 + $0x8] sm:$0xff]
      %v285 = vld [vmem:[%s1 + $0x10] sm:$0xff]
      %v286 = vld [vmem:[%s1 + $0x18] sm:$0xff]
      %v287 = vld [vmem:[%s1 + $0x20] sm:$0xff]
      %v288 = vld [vmem:[%s1 + $0x28] sm:$0xff]
      %v289 = vld [vmem:[%s1 + $0x30] sm:$0xff]
      %v290 = vld [vmem:[%s1 + $0x38] sm:$0xff]
      %v291 = vld [vmem:[%s1 + $0x40] sm:$0xff]
      %v292 = vld [vmem:[%s1 + $0x48] sm:$0xff]
      %v293 = vld [vmem:[%s1 + $0x50] sm:$0xff]
      %v294 = vld [vmem:[%s1 + $0x58] sm:$0xff]
      %v295 = vld [vmem:[%s2] sm:$0xff]
      %v296 = vld [vmem:[%s2 + $0x8] sm:$0xff]
      %v297 = vld [vmem:[%s2 + $0x10] sm:$0xff]
      %v298 = vld [vmem:[%s2 + $0x18] sm:$0xff]
      %v299 = vld [vmem:[%s2 + $0x20] sm:$0xff]
      %v300 = vld [vmem:[%s2 + $0x28] sm:$0xff]
      %v301 = vld [vmem:[%s2 + $0x30] sm:$0xff]
      %v302 = vld [vmem:[%s2 + $0x38] sm:$0xff]
      %v303 = vld [vmem:[%s2 + $0x40] sm:$0xff]
      %v304 = vld [vmem:[%s2 + $0x48] sm:$0xff]
      %v305 = vld [vmem:[%s2 + $0x50] sm:$0xff]
      %v306 = vld [vmem:[%s2 + $0x58] sm:$0xff]
      %308 = vset.pattern.permute.xlu0 0
      %309 = vperm.xlu0 %308, %v295
      %v310 = vpop.permute.xlu0 %309
      %313 = vset.pattern.permute.xlu0 0
      %314 = vperm.xlu0 %313, %v296
      %v315 = vpop.permute.xlu0 %314
      %318 = vset.pattern.permute.xlu0 0
      %319 = vperm.xlu0 %318, %v297
      %v320 = vpop.permute.xlu0 %319
      %323 = vset.pattern.permute.xlu0 0
      %324 = vperm.xlu0 %323, %v298
      %v325 = vpop.permute.xlu0 %324
      %328 = vset.pattern.permute.xlu0 0
      %329 = vperm.xlu0 %328, %v299
      %v330 = vpop.permute.xlu0 %329
      %333 = vset.pattern.permute.xlu0 0
      %334 = vperm.xlu0 %333, %v300
      %v335 = vpop.permute.xlu0 %334
      %338 = vset.pattern.permute.xlu0 0
      %339 = vperm.xlu0 %338, %v301
      %v340 = vpop.permute.xlu0 %339
      %343 = vset.pattern.permute.xlu0 0
      %344 = vperm.xlu0 %343, %v302
      %v345 = vpop.permute.xlu0 %344
      %348 = vset.pattern.permute.xlu0 0
      %349 = vperm.xlu0 %348, %v303
      %v350 = vpop.permute.xlu0 %349
      %353 = vset.pattern.permute.xlu0 0
      %354 = vperm.xlu0 %353, %v304
      %v355 = vpop.permute.xlu0 %354
      %358 = vset.pattern.permute.xlu0 0
      %359 = vperm.xlu0 %358, %v305
      %v360 = vpop.permute.xlu0 %359
      %363 = vset.pattern.permute.xlu0 0
      %364 = vperm.xlu0 %363, %v306
      %v365 = vpop.permute.xlu0 %364
      %vm367 = vcmask 130048
      %v369 = vsel %vm367, %v283, 0
      %v372 = vsel %vm367, %v284, 0
      %v375 = vsel %vm367, %v285, 0
      %v378 = vsel %vm367, %v286, 0
      %v381 = vsel %vm367, %v287, 0
      %v384 = vsel %vm367, %v288, 0
      %v387 = vsel %vm367, %v289, 0
      %v390 = vsel %vm367, %v290, 0
      %v393 = vsel %vm367, %v291, 0
      %v396 = vsel %vm367, %v292, 0
      %v399 = vsel %vm367, %v293, 0
      %v402 = vsel %vm367, %v294, 0
      %404 = vmatpush.msra.mxu0 0.0
      %405 = vmatpush.msra.mxu0 0.0
      %406 = vmatpush.msra.mxu0 0.0
      %407 = vmatpush.msra.mxu0 0.0
      %408 = vmatpush.msra.mxu0 0.0
      %409 = vmatpush.msra.mxu0 0.0
      %410 = vmatpush.msra.mxu0 0.0
      %411 = vmatpush.msra.mxu0 0.0
      %412 = vmatpush.msra.mxu0 0.0
      %413 = vmatpush.msra.mxu0 0.0
      %414 = vmatpush.msra.mxu0 0.0
      %415 = vmatpush.msra.mxu0 0.0
      %416 = vmatpush.msra.mxu0 0.0
      %417 = vmatpush.msra.mxu0 0.0
      %418 = vmatpush.msra.mxu0 %v281
      %419 = vmatpush.msra.mxu0 %v279
      %420 = vmatmul.f32.gmra.mxu0 %v369
      %v421 = vpop.f32.mrf.mxu0
      %v422 = vadd.f32 %v310, %v421
      %423 = vmatmul.f32.gmra.mxu0 %v372
      %v424 = vpop.f32.mrf.mxu0
      %v425 = vadd.f32 %v315, %v424
      %426 = vmatmul.f32.gmra.mxu0 %v375
      %v427 = vpop.f32.mrf.mxu0
      %v428 = vadd.f32 %v320, %v427
      %429 = vmatmul.f32.gmra.mxu0 %v378
      %v430 = vpop.f32.mrf.mxu0
      %v431 = vadd.f32 %v325, %v430
      %432 = vmatmul.f32.gmra.mxu0 %v381
      %v433 = vpop.f32.mrf.mxu0
      %v434 = vadd.f32 %v330, %v433
      %435 = vmatmul.f32.gmra.mxu0 %v384
      %v436 = vpop.f32.mrf.mxu0
      %v437 = vadd.f32 %v335, %v436
      %438 = vmatmul.f32.gmra.mxu0 %v387
      %v439 = vpop.f32.mrf.mxu0
      %v440 = vadd.f32 %v340, %v439
      %441 = vmatmul.f32.gmra.mxu0 %v390
      %v442 = vpop.f32.mrf.mxu0
      %v443 = vadd.f32 %v345, %v442
      %444 = vmatmul.f32.gmra.mxu0 %v393
      %v445 = vpop.f32.mrf.mxu0
      %v446 = vadd.f32 %v350, %v445
      %447 = vmatmul.f32.gmra.mxu0 %v396
      %v448 = vpop.f32.mrf.mxu0
      %v449 = vadd.f32 %v355, %v448
      %450 = vmatmul.f32.gmra.mxu0 %v399
      %v451 = vpop.f32.mrf.mxu0
      %v452 = vadd.f32 %v360, %v451
      %453 = vmatmul.f32.gmra.mxu0 %v402
      %v454 = vpop.f32.mrf.mxu0
      %v455 = vadd.f32 %v365, %v454
      %456 = vdwg.mxu0
      %457 = vmatpush.msra.mxu0 0.0
      %458 = vmatpush.msra.mxu0 0.0
      %459 = vmatpush.msra.mxu0 0.0
      %460 = vmatpush.msra.mxu0 0.0
      %461 = vmatpush.msra.mxu0 0.0
      %462 = vmatpush.msra.mxu0 0.0
      %463 = vmatpush.msra.mxu0 0.0
      %464 = vmatpush.msra.mxu0 0.0
      %465 = vmatpush.msra.mxu0 0.0
      %466 = vmatpush.msra.mxu0 0.0
      %467 = vmatpush.msra.mxu0 0.0
      %468 = vmatpush.msra.mxu0 0.0
      %469 = vmatpush.msra.mxu0 0.0
      %470 = vmatpush.msra.mxu0 0.0
      %471 = vmatpush.msra.mxu0 %v282
      %472 = vmatpush.msra.mxu0 %v280
      %473 = vmatmul.f32.gmra.mxu0 %v369
      %v474 = vpop.f32.mrf.mxu0
      %v475 = vadd.f32 %v310, %v474
      %476 = vmatmul.f32.gmra.mxu0 %v372
      %v477 = vpop.f32.mrf.mxu0
      %v478 = vadd.f32 %v315, %v477
      %479 = vmatmul.f32.gmra.mxu0 %v375
      %v480 = vpop.f32.mrf.mxu0
      %v481 = vadd.f32 %v320, %v480
      %482 = vmatmul.f32.gmra.mxu0 %v378
      %v483 = vpop.f32.mrf.mxu0
      %v484 = vadd.f32 %v325, %v483
      %485 = vmatmul.f32.gmra.mxu0 %v381
      %v486 = vpop.f32.mrf.mxu0
      %v487 = vadd.f32 %v330, %v486
      %488 = vmatmul.f32.gmra.mxu0 %v384
      %v489 = vpop.f32.mrf.mxu0
      %v490 = vadd.f32 %v335, %v489
      %491 = vmatmul.f32.gmra.mxu0 %v387
      %v492 = vpop.f32.mrf.mxu0
      %v493 = vadd.f32 %v340, %v492
      %494 = vmatmul.f32.gmra.mxu0 %v390
      %v495 = vpop.f32.mrf.mxu0
      %v496 = vadd.f32 %v345, %v495
      %497 = vmatmul.f32.gmra.mxu0 %v393
      %v498 = vpop.f32.mrf.mxu0
      %v499 = vadd.f32 %v350, %v498
      %500 = vmatmul.f32.gmra.mxu0 %v396
      %v501 = vpop.f32.mrf.mxu0
      %v502 = vadd.f32 %v355, %v501
      %503 = vmatmul.f32.gmra.mxu0 %v399
      %v504 = vpop.f32.mrf.mxu0
      %v505 = vadd.f32 %v360, %v504
      %506 = vmatmul.f32.gmra.mxu0 %v402
      %v507 = vpop.f32.mrf.mxu0
      %v508 = vadd.f32 %v365, %v507
      %509 = vdwg.mxu0
      %v510 = vlaneseq
      %v511 = vand.u32 %v510, 127
      %v512 = vadd.s32 %v511, 128
      %vm513 = vcmp.ge.s32.totalorder %v511, 64
      %vm514 = vcmp.ge.s32.totalorder %v512, 64
      %vm515 = vcmp.lt.s32.totalorder %v511, 192
      %vm516 = vcmp.lt.s32.totalorder %v512, 192
      %vm517 = vmand %vm513, %vm515
      %vm518 = vmand %vm514, %vm516
      %v519 = vmax.f32 %v422, 0.0
      %v520 = vmax.f32 %v475, 0.0
      %v521 = vmax.f32 %v425, 0.0
      %v522 = vmax.f32 %v478, 0.0
      %v523 = vmax.f32 %v428, 0.0
      %v524 = vmax.f32 %v481, 0.0
      %v525 = vmax.f32 %v431, 0.0
      %v526 = vmax.f32 %v484, 0.0
      %v527 = vmax.f32 %v434, 0.0
      %v528 = vmax.f32 %v487, 0.0
      %v529 = vsel %vm517, 1, 0
      %v530 = vsel %vm518, 1, 0
      %vm531 = vcmp.eq.s32.totalorder %v529, 1
      %vm532 = vcmp.eq.s32.totalorder %v530, 1
      %v533 = vsel %vm531, %v519, 0.0
      %v534 = vsel %vm532, %v520, 0.0
      %v535 = vsel %vm531, %v521, 0.0
      %v536 = vsel %vm532, %v522, 0.0
      %v537 = vsel %vm531, %v523, 0.0
      %v538 = vsel %vm532, %v524, 0.0
      %v539 = vsel %vm531, %v525, 0.0
      %v540 = vsel %vm532, %v526, 0.0
      %v541 = vsel %vm531, %v527, 0.0
      %v542 = vsel %vm532, %v528, 0.0
      %543 = vrot.lane.b32.xlu0 %v533, 16
      %v544 = vpop.permute.xlu0 %543
      %545 = vrot.lane.b32.xlu0 %v534, 16
      %v546 = vpop.permute.xlu0 %545
      %vm547 = vcmp.lt.s32.totalorder %v511, 16
      %v548 = vsel %vm547, %v544, %v546
      %v549 = vsel %vm547, %v546, %v544
      %550 = vrot.lane.b32.xlu0 %v533, 112
      %v551 = vpop.permute.xlu0 %550
      %552 = vrot.lane.b32.xlu0 %v534, 112
      %v553 = vpop.permute.xlu0 %552
      %vm554 = vcmp.lt.s32.totalorder %v511, 112
      %v555 = vsel %vm554, %v551, %v553
      %v556 = vsel %vm554, %v553, %v551
      %557 = vrot.lane.b32.xlu0 %v535, 32
      %v558 = vpop.permute.xlu0 %557
      %559 = vrot.lane.b32.xlu0 %v536, 32
      %v560 = vpop.permute.xlu0 %559
      %vm561 = vcmp.lt.s32.totalorder %v511, 32
      %v562 = vsel %vm561, %v558, %v560
      %v563 = vsel %vm561, %v560, %v558
      %564 = vrot.lane.b32.xlu0 %v535, 96
      %v565 = vpop.permute.xlu0 %564
      %566 = vrot.lane.b32.xlu0 %v536, 96
      %v567 = vpop.permute.xlu0 %566
      %vm568 = vcmp.lt.s32.totalorder %v511, 96
      %v569 = vsel %vm568, %v565, %v567
      %v570 = vsel %vm568, %v567, %v565
      %571 = vrot.lane.b32.xlu0 %v537, 48
      %v572 = vpop.permute.xlu0 %571
      %573 = vrot.lane.b32.xlu0 %v538, 48
      %v574 = vpop.permute.xlu0 %573
      %vm575 = vcmp.lt.s32.totalorder %v511, 48
      %v576 = vsel %vm575, %v572, %v574
      %v577 = vsel %vm575, %v574, %v572
      %578 = vrot.lane.b32.xlu0 %v537, 80
      %v579 = vpop.permute.xlu0 %578
      %580 = vrot.lane.b32.xlu0 %v538, 80
      %v581 = vpop.permute.xlu0 %580
      %vm582 = vcmp.lt.s32.totalorder %v511, 80
      %v583 = vsel %vm582, %v579, %v581
      %v584 = vsel %vm582, %v581, %v579
      %585 = vrot.lane.b32.xlu0 %v539, 64
      %v586 = vpop.permute.xlu0 %585
      %587 = vrot.lane.b32.xlu0 %v540, 64
      %v588 = vpop.permute.xlu0 %587
      %vm589 = vcmp.lt.s32.totalorder %v511, 64
      %v590 = vsel %vm589, %v586, %v588
      %v591 = vsel %vm589, %v588, %v586
      %v592 = vld [vmem:[%s3] sm:$0xff]
      %v593 = vld [vmem:[%s3 + $0x8] sm:$0xff]
      %v594 = vld [vmem:[%s3 + $0x10] sm:$0xff]
      %v595 = vld [vmem:[%s3 + $0x18] sm:$0xff]
      %v596 = vld [vmem:[%s4] sm:$0xff]
      %v597 = vld [vmem:[%s4 + $0x8] sm:$0xff]
      %v598 = vld [vmem:[%s4 + $0x10] sm:$0xff]
      %v599 = vld [vmem:[%s4 + $0x18] sm:$0xff]
      %601 = vset.pattern.permute.xlu0 0
      %602 = vperm.xlu0 %601, %v596
      %v603 = vpop.permute.xlu0 %602
      %606 = vset.pattern.permute.xlu0 0
      %607 = vperm.xlu0 %606, %v597
      %v608 = vpop.permute.xlu0 %607
      %611 = vset.pattern.permute.xlu0 0
      %612 = vperm.xlu0 %611, %v598
      %v613 = vpop.permute.xlu0 %612
      %616 = vset.pattern.permute.xlu0 0
      %617 = vperm.xlu0 %616, %v599
      %v618 = vpop.permute.xlu0 %617
      %vm620 = vcmask 785408
      %v622 = vsel %vm620, %v592, 0
      %v625 = vsel %vm620, %v593, 0
      %v628 = vsel %vm620, %v594, 0
      %v631 = vsel %vm620, %v595, 0
      %633 = vmatpush.msra.mxu0 0.0
      %634 = vmatpush.msra.mxu0 0.0
      %635 = vmatpush.msra.mxu0 0.0
      %636 = vmatpush.msra.mxu0 0.0
      %637 = vmatpush.msra.mxu0 %v590
      %638 = vmatpush.msra.mxu0 %v539
      %639 = vmatpush.msra.mxu0 %v591
      %640 = vmatpush.msra.mxu0 %v583
      %641 = vmatpush.msra.mxu0 %v537
      %642 = vmatpush.msra.mxu0 %v577
      %643 = vmatpush.msra.mxu0 %v569
      %644 = vmatpush.msra.mxu0 %v535
      %645 = vmatpush.msra.mxu0 %v563
      %646 = vmatpush.msra.mxu0 %v555
      %647 = vmatpush.msra.mxu0 %v533
      %648 = vmatpush.msra.mxu0 %v549
      %649 = vmatmul.f32.gmra.mxu0 %v622
      %v650 = vpop.f32.mrf.mxu0
      %v651 = vadd.f32 %v603, %v650
      %652 = vmatmul.f32.gmra.mxu0 %v625
      %v653 = vpop.f32.mrf.mxu0
      %v654 = vadd.f32 %v608, %v653
      %655 = vmatmul.f32.gmra.mxu0 %v628
      %v656 = vpop.f32.mrf.mxu0
      %v657 = vadd.f32 %v613, %v656
      %658 = vmatmul.f32.gmra.mxu0 %v631
      %v659 = vpop.f32.mrf.mxu0
      %v660 = vadd.f32 %v618, %v659
      %661 = vdwg.mxu0
      %662 = vmatpush.msra.mxu0 0.0
      %663 = vmatpush.msra.mxu0 0.0
      %664 = vmatpush.msra.mxu0 0.0
      %665 = vmatpush.msra.mxu0 0.0
      %666 = vmatpush.msra.mxu0 %v591
      %667 = vmatpush.msra.mxu0 %v540
      %668 = vmatpush.msra.mxu0 %v590
      %669 = vmatpush.msra.mxu0 %v584
      %670 = vmatpush.msra.mxu0 %v538
      %671 = vmatpush.msra.mxu0 %v576
      %672 = vmatpush.msra.mxu0 %v570
      %673 = vmatpush.msra.mxu0 %v536
      %674 = vmatpush.msra.mxu0 %v562
      %675 = vmatpush.msra.mxu0 %v556
      %676 = vmatpush.msra.mxu0 %v534
      %677 = vmatpush.msra.mxu0 %v548
      %678 = vmatmul.f32.gmra.mxu0 %v622
      %v679 = vpop.f32.mrf.mxu0
      %v680 = vadd.f32 %v603, %v679
      %681 = vmatmul.f32.gmra.mxu0 %v625
      %v682 = vpop.f32.mrf.mxu0
      %v683 = vadd.f32 %v608, %v682
      %684 = vmatmul.f32.gmra.mxu0 %v628
      %v685 = vpop.f32.mrf.mxu0
      %v686 = vadd.f32 %v613, %v685
      %687 = vmatmul.f32.gmra.mxu0 %v631
      %v688 = vpop.f32.mrf.mxu0
      %v689 = vadd.f32 %v618, %v688
      %690 = vdwg.mxu0
      %691 = vrot.lane.b32.xlu0 %v541, 16
      %v692 = vpop.permute.xlu0 %691
      %693 = vrot.lane.b32.xlu0 %v542, 16
      %v694 = vpop.permute.xlu0 %693
      %v695 = vsel %vm547, %v692, %v694
      %v696 = vsel %vm547, %v694, %v692
      %v697 = vmax.f32 %v696, %v541
      %v698 = vmax.f32 %v695, %v542
      %699 = vrot.lane.b32.xlu0 %v541, 112
      %v700 = vpop.permute.xlu0 %699
      %701 = vrot.lane.b32.xlu0 %v542, 112
      %v702 = vpop.permute.xlu0 %701
      %v703 = vsel %vm554, %v700, %v702
      %v704 = vsel %vm554, %v702, %v700
      %v705 = vmax.f32 %v697, %v703
      %v706 = vmax.f32 %v698, %v704
      %v707 = vld [vmem:[%s5] sm:$0xff]
      %709 = vset.pattern.permute.xlu0 0
      %710 = vperm.xlu0 %709, %v707
      %v711 = vpop.permute.xlu0 %710
      %v713 = vmul.f32 %v705, %v711
      %v714 = vmul.f32 %v706, %v711
      %v715 = vld [vmem:[%s6] sm:$0xff]
      %717 = vset.pattern.permute.xlu0 0
      %718 = vperm.xlu0 %717, %v715
      %v719 = vpop.permute.xlu0 %718
      %v721 = vadd.f32 %v713, %v719
      %v722 = vadd.f32 %v714, %v719
      %v723 = vadd.f32 %v651, %v440
      %v724 = vadd.f32 %v680, %v493
      %v725 = vadd.f32 %v654, %v443
      %v726 = vadd.f32 %v683, %v496
      %v727 = vadd.f32 %v657, %v446
      %v728 = vadd.f32 %v686, %v499
      %v729 = vadd.f32 %v660, %v449
      %v730 = vadd.f32 %v689, %v502
      %v731 = vadd.f32 %v721, %v452
      %v732 = vadd.f32 %v722, %v505
      %v733 = vadd.f32 %v437, %v455
      %v734 = vadd.f32 %v490, %v508
      %735 = vrot.lane.b32.xlu0 %v723, 64
      %v736 = vpop.permute.xlu0 %735
      %737 = vrot.lane.b32.xlu0 %v725, 64
      %v738 = vpop.permute.xlu0 %737
      %739 = vrot.lane.b32.xlu0 %v727, 64
      %v740 = vpop.permute.xlu0 %739
      %741 = vrot.lane.b32.xlu0 %v729, 64
      %v742 = vpop.permute.xlu0 %741
      %743 = vrot.lane.b32.xlu0 %v731, 64
      %v744 = vpop.permute.xlu0 %743
      %745 = vrot.lane.b32.xlu0 %v733, 64
      %v746 = vpop.permute.xlu0 %745
      %747 = vrot.lane.b32.xlu0 %v724, 64
      %v748 = vpop.permute.xlu0 %747
      %749 = vrot.lane.b32.xlu0 %v726, 64
      %v750 = vpop.permute.xlu0 %749
      %751 = vrot.lane.b32.xlu0 %v728, 64
      %v752 = vpop.permute.xlu0 %751
      %753 = vrot.lane.b32.xlu0 %v730, 64
      %v754 = vpop.permute.xlu0 %753
      %755 = vrot.lane.b32.xlu0 %v732, 64
      %v756 = vpop.permute.xlu0 %755
      %757 = vrot.lane.b32.xlu0 %v734, 64
      %v758 = vpop.permute.xlu0 %757
      %v759 = vsel %vm589, %v736, %v748
      %v760 = vsel %vm589, %v738, %v750
      %v761 = vsel %vm589, %v740, %v752
      %v762 = vsel %vm589, %v742, %v754
      %v763 = vsel %vm589, %v744, %v756
      %v764 = vsel %vm589, %v746, %v758
      %765 = vst [vmem:[%s278] sm:$0xff] %v759
      %766 = vst [vmem:[%s278 + $0x8] sm:$0xff] %v760
      %767 = vst [vmem:[%s278 + $0x10] sm:$0xff] %v761
      %768 = vst [vmem:[%s278 + $0x18] sm:$0xff] %v762
      %769 = vst [vmem:[%s278 + $0x20] sm:$0xff] %v763
      %770 = vst [vmem:[%s278 + $0x28] sm:$0xff] %v764
      %p771 = scmp.lt.s32.totalorder %s18, 1
      %s772 = scalar_select %p771, %s18, 1
      %s773 = smul.addr %s772, 6
      %s774 = smul.addr %s773, 8
      %s775 = scalar_lea.vmem %s7, %s774
      // Predicated region
      $region49: #{cnn_block_forward.1} parent=47 // pred_check
        %p776 = pneg %p188
      $region50: #{cnn_block_forward.1} parent=47 // pred_check_branch
        %778 = sbr.rel (%p776) target = $region52
      $region51: #{cnn_block_forward.1} parent=47 // pred_region
        _
      $region52: #{cnn_block_forward.1} parent=47 // pred_fallthru
        _
    $region48: #{cnn_block_forward.1} parent=5 // pred_fallthru
      _
    %p779 = scmp.le.s32.totalorder 2, %s13
    // Predicated region
    $region53: #{cnn_block_forward.1} parent=5 // pred_check
      %p780 = pneg %p779
    $region54: #{cnn_block_forward.1} parent=5 // pred_check_branch
      %782 = sbr.rel (%p780) target = $region56
    $region55: #{cnn_block_forward.1} parent=5 // pred_region
      %s783 = ssub.s32 %s13, 2
      // Predicated region
      $region57: #{cnn_block_forward.1} parent=55 // pred_check
        %p784 = pneg %p194
      $region58: #{cnn_block_forward.1} parent=55 // pred_check_branch
        %786 = sbr.rel (%p784) target = $region60
      $region59: #{cnn_block_forward.1} parent=55 // pred_region
        %p787 = scmp.lt.s32.totalorder %s19, 1
        %s788 = scalar_select %p787, %s19, 1
        %s789 = smul.addr %s788, 6
        %s790 = smul.addr %s789, 8
        %s791 = scalar_lea.vmem %s7, %s790
      $region60: #{cnn_block_forward.1} parent=55 // pred_fallthru
        _
    $region56: #{cnn_block_forward.1} parent=5 // pred_fallthru
      _
  $region6: #{cnn_block_forward.1} parent=0 // loop_footer
    %s17 = sadd.s32 1, %s13
  $region7: #{cnn_block_forward.1} parent=0 // loop_footer_branch
    %12 = sbr.rel target = $region3
  $region8: #{cnn_block_forward.1} parent=0 // loop_exit
    _

</llo_original>
